<compile_context>
chip_gen: v7x
topology: tpu7x:2x2x1
jax: 0.10.0
libtpu: 0.0.40
codegen_flags: <defaults>
</compile_context>

<pallas_src>
import jax
import jax.numpy as jnp
from jax.experimental import pallas as pl
from jax.experimental.pallas import tpu as pltpu

_SQRT_2_OVER_PI = 0.7978845608028654


def _gelu_tanh(x):
    # TODO(synk): PyTorch nn.GELU() default is the exact erf form; erf lowering
    # is not guaranteed in Mosaic, so the tanh approximation is used (~1e-3
    # deviation vs. a PyTorch reference).
    return 0.5 * x * (1.0 + jnp.tanh(_SQRT_2_OVER_PI * (x + 0.044715 * x * x * x)))


def _cdiv(a, b):
    return -(-a // b)


def _round_up(n, m):
    return (n + m - 1) // m * m


def _vmem_usable_bytes():
    """(usable_budget, physical_capacity): leave headroom for Mosaic scratch."""
    try:
        cap = int(pltpu.get_tpu_info().vmem_capacity_bytes)
    except Exception:
        cap = 64 << 20  # conservative (v7x per-TC)
    usable = max(min(cap - (12 << 20), int(cap * 0.82)), 16 << 20)
    return usable, cap


# ----------------------------------------------------------------------------
# Kernel: grid = (row_tiles [parallel], hidden_chunks [arbitrary])
# ----------------------------------------------------------------------------
def mlp_kernel(x_ref, w1_ref, b1_ref, w2_ref, b2_ref, o_ref, acc_ref):
    k = pl.program_id(1)

    @pl.when(k == 0)
    def _():
        acc_ref[...] = jnp.zeros_like(acc_ref)

    # fc1 for this hidden chunk: bf16 MXU matmul with f32 accumulation.
    h = jnp.dot(x_ref[...], w1_ref[...], preferred_element_type=jnp.float32)
    # Bias add + GELU in f32 on the VPU (v5e has no bf16 VALU/EUP).
    h = _gelu_tanh(h + b1_ref[...])
    # TODO(synk): Dropout(p=0.1) is identity in eval mode; training-mode parity
    # would need pltpu.prng_seed/prng_random_bits masking + 1/(1-p) scaling.
    # fc2 partial: accumulate this hidden chunk's contribution in f32 VMEM.
    acc_ref[...] += jnp.dot(h.astype(w2_ref.dtype), w2_ref[...],
                            preferred_element_type=jnp.float32)

    @pl.when(k == pl.num_programs(1) - 1)
    def _():
        o_ref[...] = (acc_ref[...] + b2_ref[...]).astype(o_ref.dtype)


# ----------------------------------------------------------------------------
# One-time parameter preparation (padding + cast hoisted out of the hot path).
# ----------------------------------------------------------------------------
def prepare_params(params, *, weight_dtype=jnp.bfloat16):
    """Pad to lane-dense (128) feature dims, cast weights, pick the K tile."""
    in_features, hidden = params["w1"].shape
    hidden2, out_features = params["w2"].shape
    assert hidden2 == hidden
    isz = jnp.dtype(weight_dtype).itemsize

    dp = _round_up(in_features, 128)
    op = _round_up(out_features, 128)
    hp128 = _round_up(hidden, 128)

    usable, _ = _vmem_usable_bytes()
    # Reserve ~half the budget for the double-buffered weight chunks
    # (one W1 column block + one W2 row block + b1 chunk per K step).
    per_k_bytes = 2 * (dp + op) * isz + 2 * 4
    tk_cap = max(128, ((usable // 2) // per_k_bytes // 128) * 128)
    nk = _cdiv(hp128, tk_cap)
    tk = _cdiv(hp128 // 128, nk) * 128       # minimal K tile for nk even chunks
    hp = tk * nk                             # hidden padded to a K-tile multiple

    # Zero padding is exact for Linear + GELU (gelu(0) = 0, 0-columns add 0).
    w1 = jnp.zeros((dp, hp), weight_dtype).at[:in_features, :hidden].set(
        params["w1"].astype(weight_dtype))
    b1 = jnp.zeros((1, hp), jnp.float32).at[0, :hidden].set(
        params["b1"].astype(jnp.float32))
    w2 = jnp.zeros((hp, op), weight_dtype).at[:hidden, :out_features].set(
        params["w2"].astype(weight_dtype))
    b2 = jnp.zeros((1, op), jnp.float32).at[0, :out_features].set(
        params["b2"].astype(jnp.float32))

    return dict(w1=w1, b1=b1, w2=w2, b2=b2,
                in_features=in_features, hidden=hidden,
                out_features=out_features,
                dp=dp, hp=hp, op=op, tk=tk, nk=int(nk),
                weight_dtype=weight_dtype)


def _pick_batch_tile(rows, dp, op, tk, isz, usable, weight_vmem, cap=1024):
    """Batch tile from the VMEM budget left after the resident weight chunks."""
    rem = max(usable - weight_vmem, 1 << 20)
    # Per-row VMEM: dbuf x tile (bf16) + dbuf out tile (f32) + f32 accumulator
    # + f32 hidden chunk + its bf16 copy for the second matmul.
    per_row = 2 * dp * isz + 2 * op * 4 + op * 4 + tk * (4 + isz)
    tb = min(int(rem // per_row), cap)
    rows8 = _round_up(rows, 8)
    if tb >= rows8:
        return min(rows8, cap)               # whole batch in one tile, no split
    # MXU-friendly granularity (256 fills the v6e/v7x 256x256 MXU; it is also a
    # multiple of v5e's 128x128 tiles).
    if tb >= 256:
        tb = (tb // 256) * 256
    elif tb >= 128:
        tb = 128
    elif tb >= 16:
        tb = (tb // 16) * 16
    else:
        tb = 8
    # Prefer an even number of row steps so both v7x TensorCores stay busy on
    # the "parallel" axis (harmless on single-TC chips).
    steps = _cdiv(rows8, tb)
    if steps > 1 and steps % 2 == 1:
        alt = _round_up(_cdiv(rows8, steps + 1), 16)
        if alt >= 16 and _cdiv(rows8, alt) % 2 == 0:
            tb = alt
    return tb


# ----------------------------------------------------------------------------
# Forward
# ----------------------------------------------------------------------------
def mlp_forward(x, prepared, *, out_dtype=None, batch_tile=None):
    """Fused MLP forward (eval mode). `prepared` comes from prepare_params()."""
    wdt = prepared["weight_dtype"]
    dp, hp, op = prepared["dp"], prepared["hp"], prepared["op"]
    tk, nk = prepared["tk"], prepared["nk"]
    in_features = prepared["in_features"]
    out_features = prepared["out_features"]
    out_dtype = x.dtype if out_dtype is None else out_dtype
    isz = jnp.dtype(wdt).itemsize
    out_isz = jnp.dtype(out_dtype).itemsize

    x2 = x.reshape(-1, in_features)
    rows = x2.shape[0]

    usable, _ = _vmem_usable_bytes()
    weight_vmem = (2 * dp * tk * isz + 2 * tk * 4
                   + 2 * tk * op * isz + 2 * op * 4)
    tb = (_pick_batch_tile(rows, dp, op, tk, isz, usable, weight_vmem)
          if batch_tile is None else batch_tile)

    # Only pad/cast the activation when needed; rows are never materialized
    # into a padded copy (ragged row blocks: padded output rows are dropped,
    # and each matmul row depends only on its own input row).
    if in_features == dp:
        x_p = x2 if x2.dtype == wdt else x2.astype(wdt)
    else:
        x_p = jnp.zeros((rows, dp), wdt).at[:, :in_features].set(x2.astype(wdt))

    grid = (_cdiv(rows, tb), nk)

    # Explicit VMEM limit sized from the actual tiles, kept under the
    # per-generation usable budget (headroom for Mosaic internal scratch).
    needed = (2 * tb * dp * isz + weight_vmem
              + 2 * tb * op * out_isz + tb * op * 4 + tb * tk * (4 + isz))
    vmem_limit = int(min(max(int(needed * 1.25), 32 << 20), usable))

    cost = pl.CostEstimate(
        flops=2 * rows * (dp * hp + hp * op),
        transcendentals=rows * hp,
        bytes_accessed=int(rows * dp * isz
                           + grid[0] * (dp * hp + hp * op) * isz
                           + (hp + op) * 4 + rows * op * out_isz),
    )

    out_p = pl.pallas_call(
        mlp_kernel,
        out_shape=jax.ShapeDtypeStruct((rows, op), out_dtype),
        grid=grid,
        in_specs=[
            pl.BlockSpec((tb, dp), lambda i, k: (i, 0)),   # x row tile
            pl.BlockSpec((dp, tk), lambda i, k: (0, k)),   # W1 hidden chunk
            pl.BlockSpec((1, tk), lambda i, k: (0, k)),    # b1 hidden chunk
            pl.BlockSpec((tk, op), lambda i, k: (k, 0)),   # W2 hidden chunk
            pl.BlockSpec((1, op), lambda i, k: (0, 0)),    # b2
        ],
        out_specs=pl.BlockSpec((tb, op), lambda i, k: (i, 0)),
        scratch_shapes=[pltpu.VMEM((tb, op), jnp.float32)],
        compiler_params=pltpu.CompilerParams(
            dimension_semantics=("parallel", "arbitrary"),
            vmem_limit_bytes=vmem_limit),
        cost_estimate=cost,
    )(x_p, prepared["w1"], prepared["b1"], prepared["w2"], prepared["b2"])

    out = out_p if out_features == op else out_p[:, :out_features]
    return out.reshape(*x.shape[:-1], out_features)


# ----------------------------------------------------------------------------
# Params / reference
# ----------------------------------------------------------------------------
def init_mlp_params(key, in_features, hidden_features, out_features):
    """f32 master params; mimics nn.Linear's U(-1/sqrt(fan_in), 1/sqrt(fan_in)).

    Weights are stored transposed ([in, out]) so the kernel computes x @ W + b.
    """
    k1, k2, k3, k4 = jax.random.split(key, 4)
    lim1 = 1.0 / (in_features ** 0.5)
    lim2 = 1.0 / (hidden_features ** 0.5)
    return {
        "w1": jax.random.uniform(k1, (in_features, hidden_features),
                                 jnp.float32, -lim1, lim1),
        "b1": jax.random.uniform(k2, (hidden_features,), jnp.float32, -lim1, lim1),
        "w2": jax.random.uniform(k3, (hidden_features, out_features),
                                 jnp.float32, -lim2, lim2),
        "b2": jax.random.uniform(k4, (out_features,), jnp.float32, -lim2, lim2),
    }


def mlp_ref(x, params, weight_dtype=jnp.bfloat16):
    """Pure-JAX reference (eval mode) using the same bf16 casts as the kernel."""
    in_features = x.shape[-1]
    x2 = x.reshape(-1, in_features).astype(weight_dtype)
    w1 = params["w1"].astype(weight_dtype)
    w2 = params["w2"].astype(weight_dtype)
    h = jnp.dot(x2, w1, preferred_element_type=jnp.float32) + params["b1"]
    h = _gelu_tanh(h)
    y = jnp.dot(h.astype(weight_dtype), w2,
                preferred_element_type=jnp.float32) + params["b2"]
    return y.astype(x.dtype).reshape(*x.shape[:-1], y.shape[-1])


if __name__ == "__main__":
    key = jax.random.PRNGKey(0)
    kx, kp = jax.random.split(key)

    B, SEQ, IN_F, HID_F, OUT_F = 2, 8, 16, 32, 32
    x = jax.random.normal(kx, (B, SEQ, IN_F), jnp.float32)
    params = init_mlp_params(kp, IN_F, HID_F, OUT_F)

    prepared = prepare_params(params)           # one-time pad + cast
    out = jax.block_until_ready(mlp_forward(x, prepared))
    ref = mlp_ref(x, params)

    assert out.shape == (B, SEQ, OUT_F), out.shape
    max_err = float(jnp.max(jnp.abs(out - ref)))
    assert jnp.allclose(out, ref, atol=2e-4, rtol=2e-4), f"max abs err={max_err}"

    print("KERNEL_OK")
</pallas_src>

<mosaic_0001>
module attributes {stable_mosaic.version = 11 : i64} {
  func.func @mlp_kernel(%arg0: i32, %arg1: i32, %arg2: memref<16x128xbf16, #tpu.memory_space<vmem>>, %arg3: memref<128x128xbf16, #tpu.memory_space<vmem>>, %arg4: memref<1x128xf32, #tpu.memory_space<vmem>>, %arg5: memref<128x128xbf16, #tpu.memory_space<vmem>>, %arg6: memref<1x128xf32, #tpu.memory_space<vmem>>, %arg7: memref<16x128xf32, #tpu.memory_space<vmem>>, %arg8: memref<16x128xf32, #tpu.memory_space<vmem>>) attributes {dimension_semantics = [#tpu.dimension_semantics<parallel>, #tpu.dimension_semantics<arbitrary>], iteration_bounds = array<i64: 1, 1>, scalar_prefetch = 0 : i64, scratch_operands = 1 : i64, tpu.core_type = #tpu.core_type<tc>, window_params = [{transform_indices = @transform_0, window_bounds = array<i64: 16, 128>}, {transform_indices = @transform_1, window_bounds = array<i64: 128, 128>}, {transform_indices = @transform_2, window_bounds = array<i64: 1, 128>}, {transform_indices = @transform_3, window_bounds = array<i64: 128, 128>}, {pipeline_mode = #tpu.pipeline_mode<synchronous>, transform_indices = @transform_4, window_bounds = array<i64: 1, 128>}, {transform_indices = @transform_5, window_bounds = array<i64: 16, 128>}]} {
    %c0_i32 = arith.constant 0 : i32
    %0 = arith.cmpi eq, %arg1, %c0_i32 : i32
    %1 = arith.extui %0 : i1 to i32
    %c0_i32_0 = arith.constant 0 : i32
    %2 = arith.cmpi ne, %1, %c0_i32_0 : i32
    scf.if %2 {
      %cst_19 = arith.constant 0.000000e+00 : f32
      %31 = vector.broadcast %cst_19 : f32 to vector<16x128xf32>
      %c0_20 = arith.constant 0 : index
      %c0_21 = arith.constant 0 : index
      %32 = vector.load %arg8[%c0_20, %c0_21] : memref<16x128xf32, #tpu.memory_space<vmem>>, vector<16x128xf32>
      tpu.vector_store %arg8[%c0_20, %c0_21], %31 {strides = array<i32>} : memref<16x128xf32, #tpu.memory_space<vmem>>, vector<16x128xf32>,
    } else {
    }
    %c0 = arith.constant 0 : index
    %c0_1 = arith.constant 0 : index
    %3 = vector.load %arg2[%c0, %c0_1] : memref<16x128xbf16, #tpu.memory_space<vmem>>, vector<16x128xbf16>
    %c0_2 = arith.constant 0 : index
    %c0_3 = arith.constant 0 : index
    %4 = vector.load %arg3[%c0_2, %c0_3] : memref<128x128xbf16, #tpu.memory_space<vmem>>, vector<128x128xbf16>
    %cst = arith.constant dense<0.000000e+00> : vector<16x128xf32>
    %5 = tpu.matmul %3, %4, %cst {dimension_numbers = #tpu.dot_dimension_numbers<[1], [0], [0], [1], [0, 0, 1, 1], [], []>} : vector<16x128xbf16>, vector<128x128xbf16>, vector<16x128xf32> -> vector<16x128xf32>
    %c0_4 = arith.constant 0 : index
    %c0_5 = arith.constant 0 : index
    %6 = vector.load %arg4[%c0_4, %c0_5] : memref<1x128xf32, #tpu.memory_space<vmem>>, vector<1x128xf32>
    %7 = vector.broadcast %6 : vector<1x128xf32> to vector<16x128xf32>
    %8 = arith.addf %5, %7 : vector<16x128xf32>
    %cst_6 = arith.constant 5.000000e-01 : f32
    %9 = vector.broadcast %cst_6 : f32 to vector<16x128xf32>
    %10 = arith.mulf %9, %8 : vector<16x128xf32>
    %cst_7 = arith.constant 4.471500e-02 : f32
    %11 = vector.broadcast %cst_7 : f32 to vector<16x128xf32>
    %12 = arith.mulf %11, %8 : vector<16x128xf32>
    %13 = arith.mulf %12, %8 : vector<16x128xf32>
    %14 = arith.mulf %13, %8 : vector<16x128xf32>
    %15 = arith.addf %8, %14 : vector<16x128xf32>
    %cst_8 = arith.constant 0.797884583 : f32
    %16 = vector.broadcast %cst_8 : f32 to vector<16x128xf32>
    %17 = arith.mulf %16, %15 : vector<16x128xf32>
    %18 = math.tanh %17 : vector<16x128xf32>
    %cst_9 = arith.constant 1.000000e+00 : f32
    %19 = vector.broadcast %cst_9 : f32 to vector<16x128xf32>
    %20 = arith.addf %19, %18 : vector<16x128xf32>
    %21 = arith.mulf %10, %20 : vector<16x128xf32>
    %c0_10 = arith.constant 0 : index
    %c0_11 = arith.constant 0 : index
    %22 = vector.load %arg8[%c0_10, %c0_11] : memref<16x128xf32, #tpu.memory_space<vmem>>, vector<16x128xf32>
    %23 = arith.truncf %21 : vector<16x128xf32> to vector<16x128xbf16>
    %c0_12 = arith.constant 0 : index
    %c0_13 = arith.constant 0 : index
    %24 = vector.load %arg5[%c0_12, %c0_13] : memref<128x128xbf16, #tpu.memory_space<vmem>>, vector<128x128xbf16>
    %cst_14 = arith.constant dense<0.000000e+00> : vector<16x128xf32>
    %25 = tpu.matmul %23, %24, %cst_14 {dimension_numbers = #tpu.dot_dimension_numbers<[1], [0], [0], [1], [0, 0, 1, 1], [], []>} : vector<16x128xbf16>, vector<128x128xbf16>, vector<16x128xf32> -> vector<16x128xf32>
    %26 = arith.addf %22, %25 : vector<16x128xf32>
    %c0_15 = arith.constant 0 : index
    %c0_16 = arith.constant 0 : index
    %27 = vector.load %arg8[%c0_15, %c0_16] : memref<16x128xf32, #tpu.memory_space<vmem>>, vector<16x128xf32>
    tpu.vector_store %arg8[%c0_15, %c0_16], %26 {strides = array<i32>} : memref<16x128xf32, #tpu.memory_space<vmem>>, vector<16x128xf32>,
    %c0_i32_17 = arith.constant 0 : i32
    %28 = arith.cmpi eq, %arg1, %c0_i32_17 : i32
    %29 = arith.extui %28 : i1 to i32
    %c0_i32_18 = arith.constant 0 : i32
    %30 = arith.cmpi ne, %29, %c0_i32_18 : i32
    scf.if %30 {
      %c0_19 = arith.constant 0 : index
      %c0_20 = arith.constant 0 : index
      %31 = vector.load %arg8[%c0_19, %c0_20] : memref<16x128xf32, #tpu.memory_space<vmem>>, vector<16x128xf32>
      %c0_21 = arith.constant 0 : index
      %c0_22 = arith.constant 0 : index
      %32 = vector.load %arg6[%c0_21, %c0_22] : memref<1x128xf32, #tpu.memory_space<vmem>>, vector<1x128xf32>
      %33 = vector.broadcast %32 : vector<1x128xf32> to vector<16x128xf32>
      %34 = arith.addf %31, %33 : vector<16x128xf32>
      %c0_23 = arith.constant 0 : index
      %c0_24 = arith.constant 0 : index
      %35 = vector.load %arg7[%c0_23, %c0_24] : memref<16x128xf32, #tpu.memory_space<vmem>>, vector<16x128xf32>
      tpu.vector_store %arg7[%c0_23, %c0_24], %34 {strides = array<i32>} : memref<16x128xf32, #tpu.memory_space<vmem>>, vector<16x128xf32>,
    } else {
    }
    return
  }
  func.func @transform_0(%arg0: i32, %arg1: i32) -> (i32, i32) {
    %c0_i32 = arith.constant 0 : i32
    %c0_i32_0 = arith.constant 0 : i32
    return %arg0, %c0_i32 : i32, i32
  }
  func.func @transform_1(%arg0: i32, %arg1: i32) -> (i32, i32) {
    %c0_i32 = arith.constant 0 : i32
    %c0_i32_0 = arith.constant 0 : i32
    return %c0_i32, %arg1 : i32, i32
  }
  func.func @transform_2(%arg0: i32, %arg1: i32) -> (i32, i32) {
    %c0_i32 = arith.constant 0 : i32
    %c0_i32_0 = arith.constant 0 : i32
    return %c0_i32, %arg1 : i32, i32
  }
  func.func @transform_3(%arg0: i32, %arg1: i32) -> (i32, i32) {
    %c0_i32 = arith.constant 0 : i32
    %c0_i32_0 = arith.constant 0 : i32
    return %arg1, %c0_i32 : i32, i32
  }
  func.func @transform_4(%arg0: i32, %arg1: i32) -> (i32, i32) {
    %c0_i32 = arith.constant 0 : i32
    %c0_i32_0 = arith.constant 0 : i32
    %c0_i32_1 = arith.constant 0 : i32
    return %c0_i32, %c0_i32_0 : i32, i32
  }
  func.func @transform_5(%arg0: i32, %arg1: i32) -> (i32, i32) {
    %c0_i32 = arith.constant 0 : i32
    %c0_i32_0 = arith.constant 0 : i32
    return %arg0, %c0_i32 : i32, i32
  }
}

</mosaic_0001>

<llo_original>
// kernel: tpu_custom_call.1
$region0: #{tpu_custom_call.1}
  #allocation0 [shape = 'u32[]', space=smem, size = 0x4, offset = 0x4, fixed_abs, tag = 'smem constant byte address 0x4 - core index']
  #allocation1 [shape = 'u32[144,128]{1,0:T(1,128)}', space=vmem, size = 0x12000, scoped, tag = 'internal scratch']
  #allocation2 [shape = 'f32[16,128]{1,0:T(8,128)}', space=vmem, size = 0x2000, scoped, tag = 'scratch operand']
  %s0 = inlined_call_operand.hbm [shape: bf16[16,128], index: 0, kind: input, shape index: {}]
  %s1 = inlined_call_operand.hbm [shape: bf16[128,128], index: 1, kind: input, shape index: {}]
  %s2 = inlined_call_operand.vmem [shape: f32[1,128], index: 2, kind: input, shape index: {}]
  %s3 = inlined_call_operand.hbm [shape: bf16[128,128], index: 3, kind: input, shape index: {}]
  %s4 = inlined_call_operand.vmem [shape: f32[1,128], index: 4, kind: input, shape index: {}]
  %s5 = inlined_call_operand.hbm [shape: f32[16,128], index: 5, kind: output, shape index: {}]
  %s6 = sld [smem:[#allocation0]]
  $region50: #{tpu_custom_call.1} parent=0
    _
  %s8 = ssub.s32 1, %s6
  %s9 = scalar_select 0, %s8, %s6
  $region1: #{tpu_custom_call.1} parent=0
    #allocation3 [shape = 'u8[4096]{0}', space=vmem, size = 0x1000, scoped, tag = 'input window, operand 0, single buffered']
    #allocation4 [shape = 's32[1]{0}', space=sflag, size = 0x4, scoped, tag = 'scoped memory for tpu_custom_call.1']
    #allocation5 [shape = 's32[1]{0}', space=sflag, size = 0x4, scoped, tag = 'scoped memory for tpu_custom_call.1']
    #allocation6 [shape = 'u8[32768]{0}', space=vmem, size = 0x8000, scoped, tag = 'input window, operand 1, single buffered']
    #allocation7 [shape = 's32[1]{0}', space=sflag, size = 0x4, scoped, tag = 'scoped memory for tpu_custom_call.1']
    #allocation8 [shape = 'u8[32768]{0}', space=vmem, size = 0x8000, scoped, tag = 'input window, operand 3, single buffered']
    #allocation9 [shape = 'u8[8192]{0}', space=vmem, size = 0x2000, scoped, tag = 'output window, operand 0, single buffered']
    %10 = vsyncpa [#allocation4], 0
    %11 = vsyncpa [#allocation7], 0
    %12 = vsyncpa [#allocation5], 0
    // Predicated region
    $region2: #{tpu_custom_call.1} parent=1 // pred_check
      _
    $region3: #{tpu_custom_call.1} parent=1 // pred_check_branch
      %14 = sbr.rel (0) target = $region5
    $region4: #{tpu_custom_call.1} parent=1 // pred_region
      %s16 = ssub.s32 128, 128
      %17 = vsyncadd [#allocation4], %s16
      %s18 = sshll.u32 [#allocation3], 4
      %s19 = int_to_ptr.vmem [resolvable:$true] %s18
      %24 = dma.hbm_to_vmem [thread:$0]  %s0, 128, %s19, [#allocation4], 64, 64, 4
    $region5: #{tpu_custom_call.1} parent=1 // pred_fallthru
      _
    // Predicated region
    $region6: #{tpu_custom_call.1} parent=1 // pred_check
      _
    $region7: #{tpu_custom_call.1} parent=1 // pred_check_branch
      %26 = sbr.rel (0) target = $region9
    $region8: #{tpu_custom_call.1} parent=1 // pred_region
      %s28 = ssub.s32 1024, 1024
      %29 = vsyncadd [#allocation7], %s28
      %s30 = sshll.u32 [#allocation6], 4
      %s31 = int_to_ptr.vmem [resolvable:$true] %s30
      %36 = dma.hbm_to_vmem [thread:$0]  %s1, 1024, %s31, [#allocation7], 64, 64, 4
    $region9: #{tpu_custom_call.1} parent=1 // pred_fallthru
      _
    // Predicated region
    $region10: #{tpu_custom_call.1} parent=1 // pred_check
      _
    $region11: #{tpu_custom_call.1} parent=1 // pred_check_branch
      %38 = sbr.rel (0) target = $region13
    $region12: #{tpu_custom_call.1} parent=1 // pred_region
      _
    $region13: #{tpu_custom_call.1} parent=1 // pred_fallthru
      _
    // Predicated region
    $region14: #{tpu_custom_call.1} parent=1 // pred_check
      _
    $region15: #{tpu_custom_call.1} parent=1 // pred_check_branch
      %40 = sbr.rel (0) target = $region17
    $region16: #{tpu_custom_call.1} parent=1 // pred_region
      %s42 = ssub.s32 1024, 1024
      %43 = vsyncadd [#allocation7], %s42
      %s44 = sshll.u32 [#allocation8], 4
      %s45 = int_to_ptr.vmem [resolvable:$true] %s44
      %50 = dma.hbm_to_vmem [thread:$0]  %s3, 1024, %s45, [#allocation7], 64, 64, 4
    $region17: #{tpu_custom_call.1} parent=1 // pred_fallthru
      _
    // Predicated region
    $region18: #{tpu_custom_call.1} parent=1 // pred_check
      _
    $region19: #{tpu_custom_call.1} parent=1 // pred_check_branch
      %52 = sbr.rel (0) target = $region21
    $region20: #{tpu_custom_call.1} parent=1 // pred_region
      _
    $region21: #{tpu_custom_call.1} parent=1 // pred_fallthru
      _
    // Predicated region
    $region22: #{tpu_custom_call.1} parent=1 // pred_check
      _
    $region23: #{tpu_custom_call.1} parent=1 // pred_check_branch
      %54 = sbr.rel (0) target = $region25
    $region24: #{tpu_custom_call.1} parent=1 // pred_region
      %55 = dma.done [#allocation4], 128
    $region25: #{tpu_custom_call.1} parent=1 // pred_fallthru
      _
    // Predicated region
    $region26: #{tpu_custom_call.1} parent=1 // pred_check
      _
    $region27: #{tpu_custom_call.1} parent=1 // pred_check_branch
      %57 = sbr.rel (0) target = $region29
    $region28: #{tpu_custom_call.1} parent=1 // pred_region
      %58 = dma.done [#allocation7], 1024
    $region29: #{tpu_custom_call.1} parent=1 // pred_fallthru
      _
    // Predicated region
    $region30: #{tpu_custom_call.1} parent=1 // pred_check
      _
    $region31: #{tpu_custom_call.1} parent=1 // pred_check_branch
      %60 = sbr.rel (0) target = $region33
    $region32: #{tpu_custom_call.1} parent=1 // pred_region
      %61 = dma.done [#allocation7], 1024
    $region33: #{tpu_custom_call.1} parent=1 // pred_fallthru
      _
    %p63 = scmp.eq.s32.totalorder 0, 0
    // Predicated region
    $region34: #{tpu_custom_call.1} parent=1 // pred_check
      %p64 = pneg %p63
    $region35: #{tpu_custom_call.1} parent=1 // pred_check_branch
      %66 = sbr.rel (%p64) target = $region37
    $region36: #{tpu_custom_call.1} parent=1 // pred_region
      %67 = vst [vmem:[#allocation2] sm:$0xff] 0.0
      %68 = vst [vmem:[#allocation2 + $0x8] sm:$0xff] 0.0
    $region37: #{tpu_custom_call.1} parent=1 // pred_fallthru
      _
    %v69 = vld [vmem:[#allocation3] sm:$0xf]
    %v70 = vld [vmem:[#allocation3 + $0x4] sm:$0xf]
    %v71 = vld [vmem:[#allocation6] sm:$0xf]
    %v72 = vld [vmem:[#allocation6 + $0x4] sm:$0xf]
    %v73 = vld [vmem:[#allocation6 + $0x8] sm:$0xf]
    %v74 = vld [vmem:[#allocation6 + $0xc] sm:$0xf]
    %v75 = vld [vmem:[#allocation6 + $0x10] sm:$0xf]
    %v76 = vld [vmem:[#allocation6 + $0x14] sm:$0xf]
    %v77 = vld [vmem:[#allocation6 + $0x18] sm:$0xf]
    %v78 = vld [vmem:[#allocation6 + $0x1c] sm:$0xf]
    %v79 = vld [vmem:[#allocation6 + $0x20] sm:$0xf]
    %v80 = vld [vmem:[#allocation6 + $0x24] sm:$0xf]
    %v81 = vld [vmem:[#allocation6 + $0x28] sm:$0xf]
    %v82 = vld [vmem:[#allocation6 + $0x2c] sm:$0xf]
    %v83 = vld [vmem:[#allocation6 + $0x30] sm:$0xf]
    %v84 = vld [vmem:[#allocation6 + $0x34] sm:$0xf]
    %v85 = vld [vmem:[#allocation6 + $0x38] sm:$0xf]
    %v86 = vld [vmem:[#allocation6 + $0x3c] sm:$0xf]
    %v87 = vld [vmem:[%s2] sm:$0x1]
    %v89 = vlaneseq
    %v90 = vshrl.u32 %v89, 7
    %v91 = vsub.s32 0, %v90
    %v92 = vrot.slane %v87, %v91
    %v96 = vunpack.c.l.b16 %v69
    %v97 = vunpack.c.l.b16 %v70
    %v98 = vpack.c.b16 %v97, %v96
    %v116 = vunpack.c.l.b16 %v71
    %v117 = vunpack.c.l.b16 %v72
    %v118 = vunpack.c.l.b16 %v73
    %v119 = vunpack.c.l.b16 %v74
    %v120 = vunpack.c.l.b16 %v75
    %v121 = vunpack.c.l.b16 %v76
    %v122 = vunpack.c.l.b16 %v77
    %v123 = vunpack.c.l.b16 %v78
    %v124 = vunpack.c.l.b16 %v79
    %v125 = vunpack.c.l.b16 %v80
    %v126 = vunpack.c.l.b16 %v81
    %v127 = vunpack.c.l.b16 %v82
    %v128 = vunpack.c.l.b16 %v83
    %v129 = vunpack.c.l.b16 %v84
    %v130 = vunpack.c.l.b16 %v85
    %v131 = vunpack.c.l.b16 %v86
    %v132 = vpack.c.b16 %v117, %v116
    %v133 = vpack.c.b16 %v119, %v118
    %v134 = vpack.c.b16 %v121, %v120
    %v135 = vpack.c.b16 %v123, %v122
    %v136 = vpack.c.b16 %v125, %v124
    %v137 = vpack.c.b16 %v127, %v126
    %v138 = vpack.c.b16 %v129, %v128
    %v139 = vpack.c.b16 %v131, %v130
    %148 = vmatprep.subr.bf16.mxu0 0
    %149 = vmatpush1.bf16.msra.mxu0 %v132
    %150 = vmatprep.subr.bf16.mxu0 0
    %151 = vmatpush1.bf16.msra.mxu0 %v133
    %152 = vmatprep.subr.bf16.mxu0 0
    %153 = vmatpush1.bf16.msra.mxu0 %v134
    %154 = vmatprep.subr.bf16.mxu0 0
    %155 = vmatpush1.bf16.msra.mxu0 %v135
    %156 = vmatprep.subr.bf16.mxu0 0
    %157 = vmatpush1.bf16.msra.mxu0 %v136
    %158 = vmatprep.subr.bf16.mxu0 0
    %159 = vmatpush1.bf16.msra.mxu0 %v137
    %160 = vmatprep.subr.bf16.mxu0 0
    %161 = vmatpush1.bf16.msra.mxu0 %v138
    %162 = vmatprep.subr.bf16.mxu0 0
    %163 = vmatpush1.bf16.msra.mxu0 %v139
    %164 = vmatprep.subr.bf16.mxu0 0
    %165 = vmatpush1.bf16.msra.mxu0 0
    %166 = vmatprep.subr.bf16.mxu0 0
    %167 = vmatpush1.bf16.msra.mxu0 0
    %168 = vmatprep.subr.bf16.mxu0 0
    %169 = vmatpush1.bf16.msra.mxu0 0
    %170 = vmatprep.subr.bf16.mxu0 0
    %171 = vmatpush1.bf16.msra.mxu0 0
    %172 = vmatprep.subr.bf16.mxu0 0
    %173 = vmatpush1.bf16.msra.mxu0 0
    %174 = vmatprep.subr.bf16.mxu0 0
    %175 = vmatpush1.bf16.msra.mxu0 0
    %176 = vmatprep.subr.bf16.mxu0 0
    %177 = vmatpush1.bf16.msra.mxu0 0
    %178 = vmatprep.subr.bf16.mxu0 0
    %179 = vmatpush1.bf16.msra.mxu0 0
    %180 = vmatprep.mubr.bf16.mxu0 0
    %181 = vmatmul.mubr.bf16.gmra.mrb[0].mxu0 %v98
    %v182 = vpop.f32.mrb[0].mxu0
    %v183 = vadd.f32 %v92, %v182
    %v184 = vpop.f32.mrb[0].mxu0
    %v185 = vpop.f32.mrb[0].mxu0
    %v186 = vadd.f32 %v92, %v185
    %v187 = vpop.f32.mrb[0].mxu0
    %188 = vdwg.mxu0
    %v189 = vmul.f32 %v183, 0.5
    %v190 = vmul.f32 %v186, 0.5
    %v191 = vmul.f32 %v183, 0.044715
    %v192 = vmul.f32 %v186, 0.044715
    %v193 = vmul.f32 %v191, %v183
    %v194 = vmul.f32 %v192, %v186
    %v195 = vmul.f32 %v193, %v183
    %v196 = vmul.f32 %v194, %v186
    %v197 = vadd.f32 %v183, %v195
    %v198 = vadd.f32 %v186, %v196
    %v199 = vmul.f32 %v197, 0.7978846
    %v200 = vmul.f32 %v198, 0.7978846
    %v201 = vtanh.pop %v199
    %v202 = vtanh.pop %v200
    %v203 = vadd.f32 %v201, 1.0
    %v204 = vadd.f32 %v202, 1.0
    %v205 = vmul.f32 %v189, %v203
    %v206 = vmul.f32 %v190, %v204
    %v207 = vld [vmem:[#allocation2] sm:$0xff]
    %v208 = vld [vmem:[#allocation2 + $0x8] sm:$0xff]
    %v209 = vpack.c.bf16 %v206, %v205
    %v210 = vld [vmem:[#allocation8] sm:$0xf]
    %v211 = vld [vmem:[#allocation8 + $0x4] sm:$0xf]
    %v212 = vld [vmem:[#allocation8 + $0x8] sm:$0xf]
    %v213 = vld [vmem:[#allocation8 + $0xc] sm:$0xf]
    %v214 = vld [vmem:[#allocation8 + $0x10] sm:$0xf]
    %v215 = vld [vmem:[#allocation8 + $0x14] sm:$0xf]
    %v216 = vld [vmem:[#allocation8 + $0x18] sm:$0xf]
    %v217 = vld [vmem:[#allocation8 + $0x1c] sm:$0xf]
    %v218 = vld [vmem:[#allocation8 + $0x20] sm:$0xf]
    %v219 = vld [vmem:[#allocation8 + $0x24] sm:$0xf]
    %v220 = vld [vmem:[#allocation8 + $0x28] sm:$0xf]
    %v221 = vld [vmem:[#allocation8 + $0x2c] sm:$0xf]
    %v222 = vld [vmem:[#allocation8 + $0x30] sm:$0xf]
    %v223 = vld [vmem:[#allocation8 + $0x34] sm:$0xf]
    %v224 = vld [vmem:[#allocation8 + $0x38] sm:$0xf]
    %v225 = vld [vmem:[#allocation8 + $0x3c] sm:$0xf]
    %v242 = vunpack.c.l.b16 %v210
    %v243 = vunpack.c.l.b16 %v211
    %v244 = vunpack.c.l.b16 %v212
    %v245 = vunpack.c.l.b16 %v213
    %v246 = vunpack.c.l.b16 %v214
    %v247 = vunpack.c.l.b16 %v215
    %v248 = vunpack.c.l.b16 %v216
    %v249 = vunpack.c.l.b16 %v217
    %v250 = vunpack.c.l.b16 %v218
    %v251 = vunpack.c.l.b16 %v219
    %v252 = vunpack.c.l.b16 %v220
    %v253 = vunpack.c.l.b16 %v221
    %v254 = vunpack.c.l.b16 %v222
    %v255 = vunpack.c.l.b16 %v223
    %v256 = vunpack.c.l.b16 %v224
    %v257 = vunpack.c.l.b16 %v225
    %v258 = vpack.c.b16 %v243, %v242
    %v259 = vpack.c.b16 %v245, %v244
    %v260 = vpack.c.b16 %v247, %v246
    %v261 = vpack.c.b16 %v249, %v248
    %v262 = vpack.c.b16 %v251, %v250
    %v263 = vpack.c.b16 %v253, %v252
    %v264 = vpack.c.b16 %v255, %v254
    %v265 = vpack.c.b16 %v257, %v256
    %274 = vmatprep.subr.bf16.mxu0 0
    %275 = vmatpush1.bf16.msra.mxu0 %v258
    %276 = vmatprep.subr.bf16.mxu0 0
    %277 = vmatpush1.bf16.msra.mxu0 %v259
    %278 = vmatprep.subr.bf16.mxu0 0
    %279 = vmatpush1.bf16.msra.mxu0 %v260
    %280 = vmatprep.subr.bf16.mxu0 0
    %281 = vmatpush1.bf16.msra.mxu0 %v261
    %282 = vmatprep.subr.bf16.mxu0 0
    %283 = vmatpush1.bf16.msra.mxu0 %v262
    %284 = vmatprep.subr.bf16.mxu0 0
    %285 = vmatpush1.bf16.msra.mxu0 %v263
    %286 = vmatprep.subr.bf16.mxu0 0
    %287 = vmatpush1.bf16.msra.mxu0 %v264
    %288 = vmatprep.subr.bf16.mxu0 0
    %289 = vmatpush1.bf16.msra.mxu0 %v265
    %290 = vmatprep.subr.bf16.mxu0 0
    %291 = vmatpush1.bf16.msra.mxu0 0
    %292 = vmatprep.subr.bf16.mxu0 0
    %293 = vmatpush1.bf16.msra.mxu0 0
    %294 = vmatprep.subr.bf16.mxu0 0
    %295 = vmatpush1.bf16.msra.mxu0 0
    %296 = vmatprep.subr.bf16.mxu0 0
    %297 = vmatpush1.bf16.msra.mxu0 0
    %298 = vmatprep.subr.bf16.mxu0 0
    %299 = vmatpush1.bf16.msra.mxu0 0
    %300 = vmatprep.subr.bf16.mxu0 0
    %301 = vmatpush1.bf16.msra.mxu0 0
    %302 = vmatprep.subr.bf16.mxu0 0
    %303 = vmatpush1.bf16.msra.mxu0 0
    %304 = vmatprep.subr.bf16.mxu0 0
    %305 = vmatpush1.bf16.msra.mxu0 0
    %306 = vmatprep.mubr.bf16.mxu0 0
    %307 = vmatmul.mubr.bf16.gmra.mrb[0].mxu0 %v209
    %v308 = vpop.f32.mrb[0].mxu0
    %v309 = vadd.f32 0.0, %v308
    %v310 = vpop.f32.mrb[0].mxu0
    %v311 = vpop.f32.mrb[0].mxu0
    %v312 = vadd.f32 0.0, %v311
    %v313 = vpop.f32.mrb[0].mxu0
    %314 = vdwg.mxu0
    %v315 = vadd.f32 %v207, %v309
    %v316 = vadd.f32 %v208, %v312
    %317 = vst [vmem:[#allocation2] sm:$0xff] %v315
    %318 = vst [vmem:[#allocation2 + $0x8] sm:$0xff] %v316
    // Predicated region
    $region38: #{tpu_custom_call.1} parent=1 // pred_check
      %p319 = pneg %p63
    $region39: #{tpu_custom_call.1} parent=1 // pred_check_branch
      %321 = sbr.rel (%p319) target = $region41
    $region40: #{tpu_custom_call.1} parent=1 // pred_region
      %v322 = vld [vmem:[#allocation2] sm:$0xff]
      %v323 = vld [vmem:[#allocation2 + $0x8] sm:$0xff]
      %v324 = vld [vmem:[%s4] sm:$0x1]
      %v326 = vlaneseq
      %v327 = vshrl.u32 %v326, 7
      %v328 = vsub.s32 0, %v327
      %v329 = vrot.slane %v324, %v328
      %v331 = vadd.f32 %v322, %v329
      %v332 = vadd.f32 %v323, %v329
      %333 = vst [vmem:[#allocation9] sm:$0xff] %v331
      %334 = vst [vmem:[#allocation9 + $0x8] sm:$0xff] %v332
    $region41: #{tpu_custom_call.1} parent=1 // pred_fallthru
      _
    // Predicated region
    $region42: #{tpu_custom_call.1} parent=1 // pred_check
      _
    $region43: #{tpu_custom_call.1} parent=1 // pred_check_branch
      %336 = sbr.rel (0) target = $region45
    $region44: #{tpu_custom_call.1} parent=1 // pred_region
      %s338 = ssub.s32 256, 256
      %339 = vsyncadd [#allocation5], %s338
      %s340 = sshll.u32 [#allocation9], 4
      %s341 = int_to_ptr.vmem [resolvable:$true] %s340
      %346 = dma.vmem_to_hbm [thread:$0]  %s341, 256, %s5, [#allocation5], 128, 128, 8
    $region45: #{tpu_custom_call.1} parent=1 // pred_fallthru
      _
    // Predicated region
    $region46: #{tpu_custom_call.1} parent=1 // pred_check
      _
    $region47: #{tpu_custom_call.1} parent=1 // pred_check_branch
      %348 = sbr.rel (0) target = $region49
    $region48: #{tpu_custom_call.1} parent=1 // pred_region
      %349 = dma.done [#allocation5], 256
    $region49: #{tpu_custom_call.1} parent=1 // pred_fallthru
      _
    %350 = vsyncpa [#allocation4], 1
    %351 = vsyncpa [#allocation7], 1
    %352 = vsyncpa [#allocation5], 1

</llo_original>
